<compile_context>
chip_gen: v7x
topology: tpu7x:2x2x1
jax: 0.10.0
libtpu: 0.0.40
codegen_flags: <defaults>
</compile_context>

<pallas_src>
import jax
import jax.numpy as jnp
from jax.experimental import pallas as pl
from jax.experimental.pallas import tpu as pltpu

_SUB, _LANE = 8, 128
_UNIT = _SUB * _LANE          # 1024 batch elements == one dense f32 vreg per row


def diversity_metric(preds, offroads=None, *, remove_offroads=True,
                     offroad_threshold=2.0, all_points=False, block_b=8192):
    """Pallas implementation of DiversityMetric.forward (all_points=False).

    preds:    (B, K, T, 2) float array
    offroads: (B, K) float array (required if remove_offroads=True)
    returns:  (B,) float32 diversity scores
    """
    if all_points:
        # TODO(synk): all_points=True branch (per-timestep pairwise norms) not implemented.
        raise NotImplementedError("all_points=True path not implemented")

    B, K, T, D = preds.shape
    assert D == 2

    if K < 2:
        # No pairs -> diversity is identically zero.
        return jnp.zeros((B,), jnp.float32)

    use_mask = bool(remove_offroads)

    # ---- host glue: one concat + one transpose, then reshape to vreg layout --
    last = preds[:, :, -1, :].astype(jnp.float32)            # (B, K, 2)
    parts = [last[..., 0], last[..., 1]]                     # (B, K) each
    if use_mask:
        if offroads is None:
            raise ValueError("Offroad scores are required to remove offroad trajectories.")
        parts.append(offroads.astype(jnp.float32))
    rows = len(parts) * K                                    # 3K (masked) or 2K
    slab2d = jnp.concatenate(parts, axis=1).T                # (rows, B)

    # ---- tiling over batch in 1024-element units -----------------------------
    n_units = pl.cdiv(B, _UNIT)
    upt = max(1, min(int(block_b) // _UNIT, n_units))        # units per grid tile
    if n_units >= 2 and pl.cdiv(n_units, upt) < 2:
        upt = pl.cdiv(n_units, 2)                            # >=2 grid steps for v7x's 2 TCs
    n_tiles = pl.cdiv(n_units, upt)
    n_units_pad = n_tiles * upt
    b_pad = n_units_pad * _UNIT
    if b_pad != B:
        slab2d = jnp.pad(slab2d, ((0, 0), (0, b_pad - B)))   # zero pads -> zero contribution
    # b = unit*1024 + sublane*128 + lane : batch densely fills sublanes AND lanes.
    slab = slab2d.reshape(rows, n_units_pad, _SUB, _LANE)

    thr = float(offroad_threshold)                           # Python literal, no captured const
    n_pairs = K * (K - 1) // 2
    n_acc = min(4, n_pairs)                                  # round-robin partial accumulators

    def kernel(slab_ref, out_ref):
        # slab_ref: (rows, upt, 8, 128)    out_ref: (upt, 8, 128)
        # Process one 1024-element unit at a time: live set ~ rows + n_acc vregs.
        for c in range(upt):
            xs = [slab_ref[k, c, :, :] for k in range(K)]                 # (8,128) each
            ys = [slab_ref[K + k, c, :, :] for k in range(K)]
            if use_mask:
                m = [(slab_ref[2 * K + k, c, :, :] < thr).astype(jnp.float32)
                     for k in range(K)]
            accs = [None] * n_acc
            p = 0
            for i in range(K):
                for j in range(i + 1, K):
                    dx = xs[i] - xs[j]
                    dy = ys[i] - ys[j]
                    d = jnp.sqrt(dx * dx + dy * dy)   # exact sqrt: d==0 is a valid input
                    if use_mask:
                        d = d * (m[i] * m[j])
                    a = p % n_acc
                    accs[a] = d if accs[a] is None else accs[a] + d
                    p += 1
            total = accs[0]
            for a in range(1, n_acc):
                total = total + accs[a]
            out_ref[c, :, :] = total                                      # dense vst

    out = pl.pallas_call(
        kernel,
        out_shape=jax.ShapeDtypeStruct((n_units_pad, _SUB, _LANE), jnp.float32),
        grid=(n_tiles,),
        in_specs=[pl.BlockSpec((rows, upt, _SUB, _LANE), lambda i: (0, i, 0, 0))],
        out_specs=pl.BlockSpec((upt, _SUB, _LANE), lambda i: (i, 0, 0)),
        compiler_params=pltpu.CompilerParams(
            dimension_semantics=("parallel",)),
    )(slab)
    return out.reshape(b_pad)[:B]


def _reference(preds, offroads, *, remove_offroads=True, offroad_threshold=2.0):
    """Pure-JAX reference mirroring the PyTorch forward (all_points=False)."""
    last = preds[:, :, -1, :].astype(jnp.float32)
    if remove_offroads:
        mask = offroads.astype(jnp.float32) < offroad_threshold
    else:
        mask = jnp.ones(last.shape[:2], dtype=bool)
    diff = last[:, :, None, :] - last[:, None, :, :]
    dist = jnp.sqrt(jnp.sum(diff * diff, axis=-1))
    m2 = mask[:, :, None] & mask[:, None, :]
    dist = jnp.where(m2, dist, 0.0)
    return jnp.sum(dist, axis=(-2, -1)) / 2.0


if __name__ == "__main__":
    key = jax.random.PRNGKey(0)
    kp, ko, kp2, ko2 = jax.random.split(key, 4)

    # Small shapes matching the module: preds (B, K, T, 2), offroads (B, K).
    B, K, T = 2, 6, 8
    preds = jax.random.normal(kp, (B, K, T, 2), dtype=jnp.float32) * 5.0
    offroads = jax.random.uniform(ko, (B, K), dtype=jnp.float32, minval=0.0, maxval=4.0)

    # remove_offroads=True path
    div = jax.block_until_ready(diversity_metric(preds, offroads))
    ref = jax.block_until_ready(_reference(preds, offroads))
    assert div.shape == (B,)
    assert jnp.allclose(div, ref, atol=1e-4, rtol=1e-4), (div, ref)

    # remove_offroads=False path (no offroad input, mask dropped statically)
    div_nf = jax.block_until_ready(diversity_metric(preds, remove_offroads=False))
    ref_nf = jax.block_until_ready(_reference(preds, offroads, remove_offroads=False))
    assert jnp.allclose(div_nf, ref_nf, atol=1e-4, rtol=1e-4), (div_nf, ref_nf)

    # Modest batch that exercises >1 grid tile, >1 in-tile unit and batch padding.
    B2 = 2100
    preds2 = jax.random.normal(kp2, (B2, K, T, 2), dtype=jnp.float32) * 5.0
    offroads2 = jax.random.uniform(ko2, (B2, K), dtype=jnp.float32, minval=0.0, maxval=4.0)
    div2 = jax.block_until_ready(diversity_metric(preds2, offroads2))
    ref2 = jax.block_until_ready(_reference(preds2, offroads2))
    assert div2.shape == (B2,)
    assert jnp.allclose(div2, ref2, atol=1e-3, rtol=1e-4), float(jnp.max(jnp.abs(div2 - ref2)))

    print("KERNEL_OK")
</pallas_src>

<mosaic_0001>
module attributes {stable_mosaic.version = 11 : i64} {
  func.func @kernel(%arg0: i32, %arg1: memref<18x1x8x128xf32, #tpu.memory_space<vmem>>, %arg2: memref<1x8x128xf32, #tpu.memory_space<vmem>>) attributes {dimension_semantics = [#tpu.dimension_semantics<parallel>], iteration_bounds = array<i64: 1>, scalar_prefetch = 0 : i64, scratch_operands = 0 : i64, tpu.core_type = #tpu.core_type<tc>, window_params = [{transform_indices = @transform_0, window_bounds = array<i64: 18, 1, 8, 128>}, {transform_indices = @transform_1, window_bounds = array<i64: 1, 8, 128>}]} {
    %c0 = arith.constant 0 : index
    %c0_0 = arith.constant 0 : index
    %c0_1 = arith.constant 0 : index
    %c0_2 = arith.constant 0 : index
    %0 = vector.load %arg1[%c0, %c0_0, %c0_1, %c0_2] : memref<18x1x8x128xf32, #tpu.memory_space<vmem>>, vector<1x1x8x128xf32>
    %1 = vector.shape_cast %0 : vector<1x1x8x128xf32> to vector<8x128xf32>
    %c1 = arith.constant 1 : index
    %c0_3 = arith.constant 0 : index
    %c0_4 = arith.constant 0 : index
    %c0_5 = arith.constant 0 : index
    %2 = vector.load %arg1[%c1, %c0_3, %c0_4, %c0_5] : memref<18x1x8x128xf32, #tpu.memory_space<vmem>>, vector<1x1x8x128xf32>
    %3 = vector.shape_cast %2 : vector<1x1x8x128xf32> to vector<8x128xf32>
    %c2 = arith.constant 2 : index
    %c0_6 = arith.constant 0 : index
    %c0_7 = arith.constant 0 : index
    %c0_8 = arith.constant 0 : index
    %4 = vector.load %arg1[%c2, %c0_6, %c0_7, %c0_8] : memref<18x1x8x128xf32, #tpu.memory_space<vmem>>, vector<1x1x8x128xf32>
    %5 = vector.shape_cast %4 : vector<1x1x8x128xf32> to vector<8x128xf32>
    %c3 = arith.constant 3 : index
    %c0_9 = arith.constant 0 : index
    %c0_10 = arith.constant 0 : index
    %c0_11 = arith.constant 0 : index
    %6 = vector.load %arg1[%c3, %c0_9, %c0_10, %c0_11] : memref<18x1x8x128xf32, #tpu.memory_space<vmem>>, vector<1x1x8x128xf32>
    %7 = vector.shape_cast %6 : vector<1x1x8x128xf32> to vector<8x128xf32>
    %c4 = arith.constant 4 : index
    %c0_12 = arith.constant 0 : index
    %c0_13 = arith.constant 0 : index
    %c0_14 = arith.constant 0 : index
    %8 = vector.load %arg1[%c4, %c0_12, %c0_13, %c0_14] : memref<18x1x8x128xf32, #tpu.memory_space<vmem>>, vector<1x1x8x128xf32>
    %9 = vector.shape_cast %8 : vector<1x1x8x128xf32> to vector<8x128xf32>
    %c5 = arith.constant 5 : index
    %c0_15 = arith.constant 0 : index
    %c0_16 = arith.constant 0 : index
    %c0_17 = arith.constant 0 : index
    %10 = vector.load %arg1[%c5, %c0_15, %c0_16, %c0_17] : memref<18x1x8x128xf32, #tpu.memory_space<vmem>>, vector<1x1x8x128xf32>
    %11 = vector.shape_cast %10 : vector<1x1x8x128xf32> to vector<8x128xf32>
    %c6 = arith.constant 6 : index
    %c0_18 = arith.constant 0 : index
    %c0_19 = arith.constant 0 : index
    %c0_20 = arith.constant 0 : index
    %12 = vector.load %arg1[%c6, %c0_18, %c0_19, %c0_20] : memref<18x1x8x128xf32, #tpu.memory_space<vmem>>, vector<1x1x8x128xf32>
    %13 = vector.shape_cast %12 : vector<1x1x8x128xf32> to vector<8x128xf32>
    %c7 = arith.constant 7 : index
    %c0_21 = arith.constant 0 : index
    %c0_22 = arith.constant 0 : index
    %c0_23 = arith.constant 0 : index
    %14 = vector.load %arg1[%c7, %c0_21, %c0_22, %c0_23] : memref<18x1x8x128xf32, #tpu.memory_space<vmem>>, vector<1x1x8x128xf32>
    %15 = vector.shape_cast %14 : vector<1x1x8x128xf32> to vector<8x128xf32>
    %c8 = arith.constant 8 : index
    %c0_24 = arith.constant 0 : index
    %c0_25 = arith.constant 0 : index
    %c0_26 = arith.constant 0 : index
    %16 = vector.load %arg1[%c8, %c0_24, %c0_25, %c0_26] : memref<18x1x8x128xf32, #tpu.memory_space<vmem>>, vector<1x1x8x128xf32>
    %17 = vector.shape_cast %16 : vector<1x1x8x128xf32> to vector<8x128xf32>
    %c9 = arith.constant 9 : index
    %c0_27 = arith.constant 0 : index
    %c0_28 = arith.constant 0 : index
    %c0_29 = arith.constant 0 : index
    %18 = vector.load %arg1[%c9, %c0_27, %c0_28, %c0_29] : memref<18x1x8x128xf32, #tpu.memory_space<vmem>>, vector<1x1x8x128xf32>
    %19 = vector.shape_cast %18 : vector<1x1x8x128xf32> to vector<8x128xf32>
    %c10 = arith.constant 10 : index
    %c0_30 = arith.constant 0 : index
    %c0_31 = arith.constant 0 : index
    %c0_32 = arith.constant 0 : index
    %20 = vector.load %arg1[%c10, %c0_30, %c0_31, %c0_32] : memref<18x1x8x128xf32, #tpu.memory_space<vmem>>, vector<1x1x8x128xf32>
    %21 = vector.shape_cast %20 : vector<1x1x8x128xf32> to vector<8x128xf32>
    %c11 = arith.constant 11 : index
    %c0_33 = arith.constant 0 : index
    %c0_34 = arith.constant 0 : index
    %c0_35 = arith.constant 0 : index
    %22 = vector.load %arg1[%c11, %c0_33, %c0_34, %c0_35] : memref<18x1x8x128xf32, #tpu.memory_space<vmem>>, vector<1x1x8x128xf32>
    %23 = vector.shape_cast %22 : vector<1x1x8x128xf32> to vector<8x128xf32>
    %c12 = arith.constant 12 : index
    %c0_36 = arith.constant 0 : index
    %c0_37 = arith.constant 0 : index
    %c0_38 = arith.constant 0 : index
    %24 = vector.load %arg1[%c12, %c0_36, %c0_37, %c0_38] : memref<18x1x8x128xf32, #tpu.memory_space<vmem>>, vector<1x1x8x128xf32>
    %25 = vector.shape_cast %24 : vector<1x1x8x128xf32> to vector<8x128xf32>
    %cst = arith.constant 2.000000e+00 : f32
    %26 = vector.broadcast %cst : f32 to vector<8x128xf32>
    %27 = arith.cmpf olt, %25, %26 : vector<8x128xf32>
    %28 = arith.extui %27 : vector<8x128xi1> to vector<8x128xi32>
    %29 = arith.sitofp %28 : vector<8x128xi32> to vector<8x128xf32>
    %c13 = arith.constant 13 : index
    %c0_39 = arith.constant 0 : index
    %c0_40 = arith.constant 0 : index
    %c0_41 = arith.constant 0 : index
    %30 = vector.load %arg1[%c13, %c0_39, %c0_40, %c0_41] : memref<18x1x8x128xf32, #tpu.memory_space<vmem>>, vector<1x1x8x128xf32>
    %31 = vector.shape_cast %30 : vector<1x1x8x128xf32> to vector<8x128xf32>
    %cst_42 = arith.constant 2.000000e+00 : f32
    %32 = vector.broadcast %cst_42 : f32 to vector<8x128xf32>
    %33 = arith.cmpf olt, %31, %32 : vector<8x128xf32>
    %34 = arith.extui %33 : vector<8x128xi1> to vector<8x128xi32>
    %35 = arith.sitofp %34 : vector<8x128xi32> to vector<8x128xf32>
    %c14 = arith.constant 14 : index
    %c0_43 = arith.constant 0 : index
    %c0_44 = arith.constant 0 : index
    %c0_45 = arith.constant 0 : index
    %36 = vector.load %arg1[%c14, %c0_43, %c0_44, %c0_45] : memref<18x1x8x128xf32, #tpu.memory_space<vmem>>, vector<1x1x8x128xf32>
    %37 = vector.shape_cast %36 : vector<1x1x8x128xf32> to vector<8x128xf32>
    %cst_46 = arith.constant 2.000000e+00 : f32
    %38 = vector.broadcast %cst_46 : f32 to vector<8x128xf32>
    %39 = arith.cmpf olt, %37, %38 : vector<8x128xf32>
    %40 = arith.extui %39 : vector<8x128xi1> to vector<8x128xi32>
    %41 = arith.sitofp %40 : vector<8x128xi32> to vector<8x128xf32>
    %c15 = arith.constant 15 : index
    %c0_47 = arith.constant 0 : index
    %c0_48 = arith.constant 0 : index
    %c0_49 = arith.constant 0 : index
    %42 = vector.load %arg1[%c15, %c0_47, %c0_48, %c0_49] : memref<18x1x8x128xf32, #tpu.memory_space<vmem>>, vector<1x1x8x128xf32>
    %43 = vector.shape_cast %42 : vector<1x1x8x128xf32> to vector<8x128xf32>
    %cst_50 = arith.constant 2.000000e+00 : f32
    %44 = vector.broadcast %cst_50 : f32 to vector<8x128xf32>
    %45 = arith.cmpf olt, %43, %44 : vector<8x128xf32>
    %46 = arith.extui %45 : vector<8x128xi1> to vector<8x128xi32>
    %47 = arith.sitofp %46 : vector<8x128xi32> to vector<8x128xf32>
    %c16 = arith.constant 16 : index
    %c0_51 = arith.constant 0 : index
    %c0_52 = arith.constant 0 : index
    %c0_53 = arith.constant 0 : index
    %48 = vector.load %arg1[%c16, %c0_51, %c0_52, %c0_53] : memref<18x1x8x128xf32, #tpu.memory_space<vmem>>, vector<1x1x8x128xf32>
    %49 = vector.shape_cast %48 : vector<1x1x8x128xf32> to vector<8x128xf32>
    %cst_54 = arith.constant 2.000000e+00 : f32
    %50 = vector.broadcast %cst_54 : f32 to vector<8x128xf32>
    %51 = arith.cmpf olt, %49, %50 : vector<8x128xf32>
    %52 = arith.extui %51 : vector<8x128xi1> to vector<8x128xi32>
    %53 = arith.sitofp %52 : vector<8x128xi32> to vector<8x128xf32>
    %c17 = arith.constant 17 : index
    %c0_55 = arith.constant 0 : index
    %c0_56 = arith.constant 0 : index
    %c0_57 = arith.constant 0 : index
    %54 = vector.load %arg1[%c17, %c0_55, %c0_56, %c0_57] : memref<18x1x8x128xf32, #tpu.memory_space<vmem>>, vector<1x1x8x128xf32>
    %55 = vector.shape_cast %54 : vector<1x1x8x128xf32> to vector<8x128xf32>
    %cst_58 = arith.constant 2.000000e+00 : f32
    %56 = vector.broadcast %cst_58 : f32 to vector<8x128xf32>
    %57 = arith.cmpf olt, %55, %56 : vector<8x128xf32>
    %58 = arith.extui %57 : vector<8x128xi1> to vector<8x128xi32>
    %59 = arith.sitofp %58 : vector<8x128xi32> to vector<8x128xf32>
    %60 = arith.subf %1, %3 : vector<8x128xf32>
    %61 = arith.subf %13, %15 : vector<8x128xf32>
    %62 = arith.mulf %60, %60 : vector<8x128xf32>
    %63 = arith.mulf %61, %61 : vector<8x128xf32>
    %64 = arith.addf %62, %63 : vector<8x128xf32>
    %65 = math.sqrt %64 : vector<8x128xf32>
    %66 = arith.mulf %29, %35 : vector<8x128xf32>
    %67 = arith.mulf %65, %66 : vector<8x128xf32>
    %68 = arith.subf %1, %5 : vector<8x128xf32>
    %69 = arith.subf %13, %17 : vector<8x128xf32>
    %70 = arith.mulf %68, %68 : vector<8x128xf32>
    %71 = arith.mulf %69, %69 : vector<8x128xf32>
    %72 = arith.addf %70, %71 : vector<8x128xf32>
    %73 = math.sqrt %72 : vector<8x128xf32>
    %74 = arith.mulf %29, %41 : vector<8x128xf32>
    %75 = arith.mulf %73, %74 : vector<8x128xf32>
    %76 = arith.subf %1, %7 : vector<8x128xf32>
    %77 = arith.subf %13, %19 : vector<8x128xf32>
    %78 = arith.mulf %76, %76 : vector<8x128xf32>
    %79 = arith.mulf %77, %77 : vector<8x128xf32>
    %80 = arith.addf %78, %79 : vector<8x128xf32>
    %81 = math.sqrt %80 : vector<8x128xf32>
    %82 = arith.mulf %29, %47 : vector<8x128xf32>
    %83 = arith.mulf %81, %82 : vector<8x128xf32>
    %84 = arith.subf %1, %9 : vector<8x128xf32>
    %85 = arith.subf %13, %21 : vector<8x128xf32>
    %86 = arith.mulf %84, %84 : vector<8x128xf32>
    %87 = arith.mulf %85, %85 : vector<8x128xf32>
    %88 = arith.addf %86, %87 : vector<8x128xf32>
    %89 = math.sqrt %88 : vector<8x128xf32>
    %90 = arith.mulf %29, %53 : vector<8x128xf32>
    %91 = arith.mulf %89, %90 : vector<8x128xf32>
    %92 = arith.subf %1, %11 : vector<8x128xf32>
    %93 = arith.subf %13, %23 : vector<8x128xf32>
    %94 = arith.mulf %92, %92 : vector<8x128xf32>
    %95 = arith.mulf %93, %93 : vector<8x128xf32>
    %96 = arith.addf %94, %95 : vector<8x128xf32>
    %97 = math.sqrt %96 : vector<8x128xf32>
    %98 = arith.mulf %29, %59 : vector<8x128xf32>
    %99 = arith.mulf %97, %98 : vector<8x128xf32>
    %100 = arith.addf %67, %99 : vector<8x128xf32>
    %101 = arith.subf %3, %5 : vector<8x128xf32>
    %102 = arith.subf %15, %17 : vector<8x128xf32>
    %103 = arith.mulf %101, %101 : vector<8x128xf32>
    %104 = arith.mulf %102, %102 : vector<8x128xf32>
    %105 = arith.addf %103, %104 : vector<8x128xf32>
    %106 = math.sqrt %105 : vector<8x128xf32>
    %107 = arith.mulf %35, %41 : vector<8x128xf32>
    %108 = arith.mulf %106, %107 : vector<8x128xf32>
    %109 = arith.addf %75, %108 : vector<8x128xf32>
    %110 = arith.subf %3, %7 : vector<8x128xf32>
    %111 = arith.subf %15, %19 : vector<8x128xf32>
    %112 = arith.mulf %110, %110 : vector<8x128xf32>
    %113 = arith.mulf %111, %111 : vector<8x128xf32>
    %114 = arith.addf %112, %113 : vector<8x128xf32>
    %115 = math.sqrt %114 : vector<8x128xf32>
    %116 = arith.mulf %35, %47 : vector<8x128xf32>
    %117 = arith.mulf %115, %116 : vector<8x128xf32>
    %118 = arith.addf %83, %117 : vector<8x128xf32>
    %119 = arith.subf %3, %9 : vector<8x128xf32>
    %120 = arith.subf %15, %21 : vector<8x128xf32>
    %121 = arith.mulf %119, %119 : vector<8x128xf32>
    %122 = arith.mulf %120, %120 : vector<8x128xf32>
    %123 = arith.addf %121, %122 : vector<8x128xf32>
    %124 = math.sqrt %123 : vector<8x128xf32>
    %125 = arith.mulf %35, %53 : vector<8x128xf32>
    %126 = arith.mulf %124, %125 : vector<8x128xf32>
    %127 = arith.addf %91, %126 : vector<8x128xf32>
    %128 = arith.subf %3, %11 : vector<8x128xf32>
    %129 = arith.subf %15, %23 : vector<8x128xf32>
    %130 = arith.mulf %128, %128 : vector<8x128xf32>
    %131 = arith.mulf %129, %129 : vector<8x128xf32>
    %132 = arith.addf %130, %131 : vector<8x128xf32>
    %133 = math.sqrt %132 : vector<8x128xf32>
    %134 = arith.mulf %35, %59 : vector<8x128xf32>
    %135 = arith.mulf %133, %134 : vector<8x128xf32>
    %136 = arith.addf %100, %135 : vector<8x128xf32>
    %137 = arith.subf %5, %7 : vector<8x128xf32>
    %138 = arith.subf %17, %19 : vector<8x128xf32>
    %139 = arith.mulf %137, %137 : vector<8x128xf32>
    %140 = arith.mulf %138, %138 : vector<8x128xf32>
    %141 = arith.addf %139, %140 : vector<8x128xf32>
    %142 = math.sqrt %141 : vector<8x128xf32>
    %143 = arith.mulf %41, %47 : vector<8x128xf32>
    %144 = arith.mulf %142, %143 : vector<8x128xf32>
    %145 = arith.addf %109, %144 : vector<8x128xf32>
    %146 = arith.subf %5, %9 : vector<8x128xf32>
    %147 = arith.subf %17, %21 : vector<8x128xf32>
    %148 = arith.mulf %146, %146 : vector<8x128xf32>
    %149 = arith.mulf %147, %147 : vector<8x128xf32>
    %150 = arith.addf %148, %149 : vector<8x128xf32>
    %151 = math.sqrt %150 : vector<8x128xf32>
    %152 = arith.mulf %41, %53 : vector<8x128xf32>
    %153 = arith.mulf %151, %152 : vector<8x128xf32>
    %154 = arith.addf %118, %153 : vector<8x128xf32>
    %155 = arith.subf %5, %11 : vector<8x128xf32>
    %156 = arith.subf %17, %23 : vector<8x128xf32>
    %157 = arith.mulf %155, %155 : vector<8x128xf32>
    %158 = arith.mulf %156, %156 : vector<8x128xf32>
    %159 = arith.addf %157, %158 : vector<8x128xf32>
    %160 = math.sqrt %159 : vector<8x128xf32>
    %161 = arith.mulf %41, %59 : vector<8x128xf32>
    %162 = arith.mulf %160, %161 : vector<8x128xf32>
    %163 = arith.addf %127, %162 : vector<8x128xf32>
    %164 = arith.subf %7, %9 : vector<8x128xf32>
    %165 = arith.subf %19, %21 : vector<8x128xf32>
    %166 = arith.mulf %164, %164 : vector<8x128xf32>
    %167 = arith.mulf %165, %165 : vector<8x128xf32>
    %168 = arith.addf %166, %167 : vector<8x128xf32>
    %169 = math.sqrt %168 : vector<8x128xf32>
    %170 = arith.mulf %47, %53 : vector<8x128xf32>
    %171 = arith.mulf %169, %170 : vector<8x128xf32>
    %172 = arith.addf %136, %171 : vector<8x128xf32>
    %173 = arith.subf %7, %11 : vector<8x128xf32>
    %174 = arith.subf %19, %23 : vector<8x128xf32>
    %175 = arith.mulf %173, %173 : vector<8x128xf32>
    %176 = arith.mulf %174, %174 : vector<8x128xf32>
    %177 = arith.addf %175, %176 : vector<8x128xf32>
    %178 = math.sqrt %177 : vector<8x128xf32>
    %179 = arith.mulf %47, %59 : vector<8x128xf32>
    %180 = arith.mulf %178, %179 : vector<8x128xf32>
    %181 = arith.addf %145, %180 : vector<8x128xf32>
    %182 = arith.subf %9, %11 : vector<8x128xf32>
    %183 = arith.subf %21, %23 : vector<8x128xf32>
    %184 = arith.mulf %182, %182 : vector<8x128xf32>
    %185 = arith.mulf %183, %183 : vector<8x128xf32>
    %186 = arith.addf %184, %185 : vector<8x128xf32>
    %187 = math.sqrt %186 : vector<8x128xf32>
    %188 = arith.mulf %53, %59 : vector<8x128xf32>
    %189 = arith.mulf %187, %188 : vector<8x128xf32>
    %190 = arith.addf %154, %189 : vector<8x128xf32>
    %191 = arith.addf %172, %181 : vector<8x128xf32>
    %192 = arith.addf %191, %190 : vector<8x128xf32>
    %193 = arith.addf %192, %163 : vector<8x128xf32>
    %c0_59 = arith.constant 0 : index
    %c0_60 = arith.constant 0 : index
    %c0_61 = arith.constant 0 : index
    %194 = vector.load %arg2[%c0_59, %c0_60, %c0_61] : memref<1x8x128xf32, #tpu.memory_space<vmem>>, vector<1x8x128xf32>
    %195 = vector.shape_cast %194 : vector<1x8x128xf32> to vector<8x128xf32>
    %196 = vector.shape_cast %193 : vector<8x128xf32> to vector<1x8x128xf32>
    tpu.vector_store %arg2[%c0_59, %c0_60, %c0_61], %196 {strides = array<i32>} : memref<1x8x128xf32, #tpu.memory_space<vmem>>, vector<1x8x128xf32>,
    return
  }
  func.func @transform_0(%arg0: i32) -> (i32, i32, i32, i32) {
    %c0_i32 = arith.constant 0 : i32
    %c0_i32_0 = arith.constant 0 : i32
    %c0_i32_1 = arith.constant 0 : i32
    %c0_i32_2 = arith.constant 0 : i32
    return %c0_i32, %arg0, %c0_i32_0, %c0_i32_1 : i32, i32, i32, i32
  }
  func.func @transform_1(%arg0: i32) -> (i32, i32, i32) {
    %c0_i32 = arith.constant 0 : i32
    %c0_i32_0 = arith.constant 0 : i32
    %c0_i32_1 = arith.constant 0 : i32
    return %arg0, %c0_i32, %c0_i32_0 : i32, i32, i32
  }
}

</mosaic_0001>

<llo_original>
// kernel: tpu_custom_call.1
$region0: #{tpu_custom_call.1}
  #allocation0 [shape = 'u32[]', space=smem, size = 0x4, offset = 0x4, fixed_abs, tag = 'smem constant byte address 0x4 - core index']
  #allocation1 [shape = 'u32[144,128]{1,0:T(1,128)}', space=vmem, size = 0x12000, scoped, tag = 'internal scratch']
  %s0 = inlined_call_operand.hbm [shape: f32[18,1,8,128], index: 0, kind: input, shape index: {}]
  %s1 = inlined_call_operand.hbm [shape: f32[1,8,128], index: 1, kind: output, shape index: {}]
  %s2 = sld [smem:[#allocation0]]
  $region18: #{tpu_custom_call.1} parent=0
    _
  %s4 = ssub.s32 1, %s2
  %s5 = scalar_select 0, %s4, %s2
  $region1: #{tpu_custom_call.1} parent=0
    #allocation2 [shape = 'u8[73728]{0}', space=vmem, size = 0x12000, scoped, tag = 'input window, operand 0, single buffered']
    #allocation3 [shape = 's32[1]{0}', space=sflag, size = 0x4, scoped, tag = 'scoped memory for tpu_custom_call.1']
    #allocation4 [shape = 's32[1]{0}', space=sflag, size = 0x4, scoped, tag = 'scoped memory for tpu_custom_call.1']
    #allocation5 [shape = 'u8[4096]{0}', space=vmem, size = 0x1000, scoped, tag = 'output window, operand 0, single buffered']
    %6 = vsyncpa [#allocation3], 0
    %7 = vsyncpa [#allocation4], 0
    // Predicated region
    $region2: #{tpu_custom_call.1} parent=1 // pred_check
      _
    $region3: #{tpu_custom_call.1} parent=1 // pred_check_branch
      %9 = sbr.rel (0) target = $region5
    $region4: #{tpu_custom_call.1} parent=1 // pred_region
      %s11 = ssub.s32 2304, 2304
      %12 = vsyncadd [#allocation3], %s11
      %s13 = sshll.u32 [#allocation2], 4
      %s14 = int_to_ptr.vmem [resolvable:$true] %s13
      %19 = dma.hbm_to_vmem [thread:$0]  %s0, 2304, %s14, [#allocation3], 128, 128, 8
    $region5: #{tpu_custom_call.1} parent=1 // pred_fallthru
      _
    // Predicated region
    $region6: #{tpu_custom_call.1} parent=1 // pred_check
      _
    $region7: #{tpu_custom_call.1} parent=1 // pred_check_branch
      %21 = sbr.rel (0) target = $region9
    $region8: #{tpu_custom_call.1} parent=1 // pred_region
      %22 = dma.done [#allocation3], 2304
    $region9: #{tpu_custom_call.1} parent=1 // pred_fallthru
      _
    %v23 = vld [vmem:[#allocation2] sm:$0xff]
    %s24 = scalar_lea.vmem [#allocation2], 8
    %v25 = vld [vmem:[%s24] sm:$0xff]
    %s26 = scalar_lea.vmem [#allocation2], 16
    %v27 = vld [vmem:[%s26] sm:$0xff]
    %s28 = scalar_lea.vmem [#allocation2], 24
    %v29 = vld [vmem:[%s28] sm:$0xff]
    %s30 = scalar_lea.vmem [#allocation2], 32
    %v31 = vld [vmem:[%s30] sm:$0xff]
    %s32 = scalar_lea.vmem [#allocation2], 40
    %v33 = vld [vmem:[%s32] sm:$0xff]
    %s34 = scalar_lea.vmem [#allocation2], 48
    %v35 = vld [vmem:[%s34] sm:$0xff]
    %s36 = scalar_lea.vmem [#allocation2], 56
    %v37 = vld [vmem:[%s36] sm:$0xff]
    %s38 = scalar_lea.vmem [#allocation2], 64
    %v39 = vld [vmem:[%s38] sm:$0xff]
    %s40 = scalar_lea.vmem [#allocation2], 72
    %v41 = vld [vmem:[%s40] sm:$0xff]
    %s42 = scalar_lea.vmem [#allocation2], 80
    %v43 = vld [vmem:[%s42] sm:$0xff]
    %s44 = scalar_lea.vmem [#allocation2], 88
    %v45 = vld [vmem:[%s44] sm:$0xff]
    %s46 = scalar_lea.vmem [#allocation2], 96
    %v47 = vld [vmem:[%s46] sm:$0xff]
    %vm48 = vcmp.lt.f32.partialorder %v47, 2.0
    %v49 = vsel %vm48, 1, 0
    %v50 = vcvt.s32.f32 %v49
    %s51 = scalar_lea.vmem [#allocation2], 104
    %v52 = vld [vmem:[%s51] sm:$0xff]
    %vm53 = vcmp.lt.f32.partialorder %v52, 2.0
    %v54 = vsel %vm53, 1, 0
    %v55 = vcvt.s32.f32 %v54
    %s56 = scalar_lea.vmem [#allocation2], 112
    %v57 = vld [vmem:[%s56] sm:$0xff]
    %vm58 = vcmp.lt.f32.partialorder %v57, 2.0
    %v59 = vsel %vm58, 1, 0
    %v60 = vcvt.s32.f32 %v59
    %s61 = scalar_lea.vmem [#allocation2], 120
    %v62 = vld [vmem:[%s61] sm:$0xff]
    %vm63 = vcmp.lt.f32.partialorder %v62, 2.0
    %v64 = vsel %vm63, 1, 0
    %v65 = vcvt.s32.f32 %v64
    %s66 = scalar_lea.vmem [#allocation2], 128
    %v67 = vld [vmem:[%s66] sm:$0xff]
    %vm68 = vcmp.lt.f32.partialorder %v67, 2.0
    %v69 = vsel %vm68, 1, 0
    %v70 = vcvt.s32.f32 %v69
    %s71 = scalar_lea.vmem [#allocation2], 136
    %v72 = vld [vmem:[%s71] sm:$0xff]
    %vm73 = vcmp.lt.f32.partialorder %v72, 2.0
    %v74 = vsel %vm73, 1, 0
    %v75 = vcvt.s32.f32 %v74
    %v76 = vsub.f32 %v23, %v25
    %v77 = vsub.f32 %v35, %v37
    %v78 = vmul.f32 %v76, %v76
    %v79 = vmul.f32 %v77, %v77
    %v80 = vadd.f32 %v78, %v79
    %v81 = vrsqrt.pop %v80
    %v82 = vmul.f32 %v80, %v81
    %vm83 = vcmp.eq.f32.partialorder %v80, inf
    %v84 = vsel %vm83, %v80, %v82
    %vm85 = vcmp.eq.f32.partialorder %v80, 0.0
    %v86 = vand.u32 %v80, 2147483648
    %v87 = vsel %vm85, %v86, %v84
    %v88 = vmul.f32 %v50, %v55
    %v89 = vmul.f32 %v87, %v88
    %v90 = vsub.f32 %v23, %v27
    %v91 = vsub.f32 %v35, %v39
    %v92 = vmul.f32 %v90, %v90
    %v93 = vmul.f32 %v91, %v91
    %v94 = vadd.f32 %v92, %v93
    %v95 = vrsqrt.pop %v94
    %v96 = vmul.f32 %v94, %v95
    %vm97 = vcmp.eq.f32.partialorder %v94, inf
    %v98 = vsel %vm97, %v94, %v96
    %vm99 = vcmp.eq.f32.partialorder %v94, 0.0
    %v100 = vand.u32 %v94, 2147483648
    %v101 = vsel %vm99, %v100, %v98
    %v102 = vmul.f32 %v50, %v60
    %v103 = vmul.f32 %v101, %v102
    %v104 = vsub.f32 %v23, %v29
    %v105 = vsub.f32 %v35, %v41
    %v106 = vmul.f32 %v104, %v104
    %v107 = vmul.f32 %v105, %v105
    %v108 = vadd.f32 %v106, %v107
    %v109 = vrsqrt.pop %v108
    %v110 = vmul.f32 %v108, %v109
    %vm111 = vcmp.eq.f32.partialorder %v108, inf
    %v112 = vsel %vm111, %v108, %v110
    %vm113 = vcmp.eq.f32.partialorder %v108, 0.0
    %v114 = vand.u32 %v108, 2147483648
    %v115 = vsel %vm113, %v114, %v112
    %v116 = vmul.f32 %v50, %v65
    %v117 = vmul.f32 %v115, %v116
    %v118 = vsub.f32 %v23, %v31
    %v119 = vsub.f32 %v35, %v43
    %v120 = vmul.f32 %v118, %v118
    %v121 = vmul.f32 %v119, %v119
    %v122 = vadd.f32 %v120, %v121
    %v123 = vrsqrt.pop %v122
    %v124 = vmul.f32 %v122, %v123
    %vm125 = vcmp.eq.f32.partialorder %v122, inf
    %v126 = vsel %vm125, %v122, %v124
    %vm127 = vcmp.eq.f32.partialorder %v122, 0.0
    %v128 = vand.u32 %v122, 2147483648
    %v129 = vsel %vm127, %v128, %v126
    %v130 = vmul.f32 %v50, %v70
    %v131 = vmul.f32 %v129, %v130
    %v132 = vsub.f32 %v23, %v33
    %v133 = vsub.f32 %v35, %v45
    %v134 = vmul.f32 %v132, %v132
    %v135 = vmul.f32 %v133, %v133
    %v136 = vadd.f32 %v134, %v135
    %v137 = vrsqrt.pop %v136
    %v138 = vmul.f32 %v136, %v137
    %vm139 = vcmp.eq.f32.partialorder %v136, inf
    %v140 = vsel %vm139, %v136, %v138
    %vm141 = vcmp.eq.f32.partialorder %v136, 0.0
    %v142 = vand.u32 %v136, 2147483648
    %v143 = vsel %vm141, %v142, %v140
    %v144 = vmul.f32 %v50, %v75
    %v145 = vmul.f32 %v143, %v144
    %v146 = vadd.f32 %v89, %v145
    %v147 = vsub.f32 %v25, %v27
    %v148 = vsub.f32 %v37, %v39
    %v149 = vmul.f32 %v147, %v147
    %v150 = vmul.f32 %v148, %v148
    %v151 = vadd.f32 %v149, %v150
    %v152 = vrsqrt.pop %v151
    %v153 = vmul.f32 %v151, %v152
    %vm154 = vcmp.eq.f32.partialorder %v151, inf
    %v155 = vsel %vm154, %v151, %v153
    %vm156 = vcmp.eq.f32.partialorder %v151, 0.0
    %v157 = vand.u32 %v151, 2147483648
    %v158 = vsel %vm156, %v157, %v155
    %v159 = vmul.f32 %v55, %v60
    %v160 = vmul.f32 %v158, %v159
    %v161 = vadd.f32 %v103, %v160
    %v162 = vsub.f32 %v25, %v29
    %v163 = vsub.f32 %v37, %v41
    %v164 = vmul.f32 %v162, %v162
    %v165 = vmul.f32 %v163, %v163
    %v166 = vadd.f32 %v164, %v165
    %v167 = vrsqrt.pop %v166
    %v168 = vmul.f32 %v166, %v167
    %vm169 = vcmp.eq.f32.partialorder %v166, inf
    %v170 = vsel %vm169, %v166, %v168
    %vm171 = vcmp.eq.f32.partialorder %v166, 0.0
    %v172 = vand.u32 %v166, 2147483648
    %v173 = vsel %vm171, %v172, %v170
    %v174 = vmul.f32 %v55, %v65
    %v175 = vmul.f32 %v173, %v174
    %v176 = vadd.f32 %v117, %v175
    %v177 = vsub.f32 %v25, %v31
    %v178 = vsub.f32 %v37, %v43
    %v179 = vmul.f32 %v177, %v177
    %v180 = vmul.f32 %v178, %v178
    %v181 = vadd.f32 %v179, %v180
    %v182 = vrsqrt.pop %v181
    %v183 = vmul.f32 %v181, %v182
    %vm184 = vcmp.eq.f32.partialorder %v181, inf
    %v185 = vsel %vm184, %v181, %v183
    %vm186 = vcmp.eq.f32.partialorder %v181, 0.0
    %v187 = vand.u32 %v181, 2147483648
    %v188 = vsel %vm186, %v187, %v185
    %v189 = vmul.f32 %v55, %v70
    %v190 = vmul.f32 %v188, %v189
    %v191 = vadd.f32 %v131, %v190
    %v192 = vsub.f32 %v25, %v33
    %v193 = vsub.f32 %v37, %v45
    %v194 = vmul.f32 %v192, %v192
    %v195 = vmul.f32 %v193, %v193
    %v196 = vadd.f32 %v194, %v195
    %v197 = vrsqrt.pop %v196
    %v198 = vmul.f32 %v196, %v197
    %vm199 = vcmp.eq.f32.partialorder %v196, inf
    %v200 = vsel %vm199, %v196, %v198
    %vm201 = vcmp.eq.f32.partialorder %v196, 0.0
    %v202 = vand.u32 %v196, 2147483648
    %v203 = vsel %vm201, %v202, %v200
    %v204 = vmul.f32 %v55, %v75
    %v205 = vmul.f32 %v203, %v204
    %v206 = vadd.f32 %v146, %v205
    %v207 = vsub.f32 %v27, %v29
    %v208 = vsub.f32 %v39, %v41
    %v209 = vmul.f32 %v207, %v207
    %v210 = vmul.f32 %v208, %v208
    %v211 = vadd.f32 %v209, %v210
    %v212 = vrsqrt.pop %v211
    %v213 = vmul.f32 %v211, %v212
    %vm214 = vcmp.eq.f32.partialorder %v211, inf
    %v215 = vsel %vm214, %v211, %v213
    %vm216 = vcmp.eq.f32.partialorder %v211, 0.0
    %v217 = vand.u32 %v211, 2147483648
    %v218 = vsel %vm216, %v217, %v215
    %v219 = vmul.f32 %v60, %v65
    %v220 = vmul.f32 %v218, %v219
    %v221 = vadd.f32 %v161, %v220
    %v222 = vsub.f32 %v27, %v31
    %v223 = vsub.f32 %v39, %v43
    %v224 = vmul.f32 %v222, %v222
    %v225 = vmul.f32 %v223, %v223
    %v226 = vadd.f32 %v224, %v225
    %v227 = vrsqrt.pop %v226
    %v228 = vmul.f32 %v226, %v227
    %vm229 = vcmp.eq.f32.partialorder %v226, inf
    %v230 = vsel %vm229, %v226, %v228
    %vm231 = vcmp.eq.f32.partialorder %v226, 0.0
    %v232 = vand.u32 %v226, 2147483648
    %v233 = vsel %vm231, %v232, %v230
    %v234 = vmul.f32 %v60, %v70
    %v235 = vmul.f32 %v233, %v234
    %v236 = vadd.f32 %v176, %v235
    %v237 = vsub.f32 %v27, %v33
    %v238 = vsub.f32 %v39, %v45
    %v239 = vmul.f32 %v237, %v237
    %v240 = vmul.f32 %v238, %v238
    %v241 = vadd.f32 %v239, %v240
    %v242 = vrsqrt.pop %v241
    %v243 = vmul.f32 %v241, %v242
    %vm244 = vcmp.eq.f32.partialorder %v241, inf
    %v245 = vsel %vm244, %v241, %v243
    %vm246 = vcmp.eq.f32.partialorder %v241, 0.0
    %v247 = vand.u32 %v241, 2147483648
    %v248 = vsel %vm246, %v247, %v245
    %v249 = vmul.f32 %v60, %v75
    %v250 = vmul.f32 %v248, %v249
    %v251 = vadd.f32 %v191, %v250
    %v252 = vsub.f32 %v29, %v31
    %v253 = vsub.f32 %v41, %v43
    %v254 = vmul.f32 %v252, %v252
    %v255 = vmul.f32 %v253, %v253
    %v256 = vadd.f32 %v254, %v255
    %v257 = vrsqrt.pop %v256
    %v258 = vmul.f32 %v256, %v257
    %vm259 = vcmp.eq.f32.partialorder %v256, inf
    %v260 = vsel %vm259, %v256, %v258
    %vm261 = vcmp.eq.f32.partialorder %v256, 0.0
    %v262 = vand.u32 %v256, 2147483648
    %v263 = vsel %vm261, %v262, %v260
    %v264 = vmul.f32 %v65, %v70
    %v265 = vmul.f32 %v263, %v264
    %v266 = vadd.f32 %v206, %v265
    %v267 = vsub.f32 %v29, %v33
    %v268 = vsub.f32 %v41, %v45
    %v269 = vmul.f32 %v267, %v267
    %v270 = vmul.f32 %v268, %v268
    %v271 = vadd.f32 %v269, %v270
    %v272 = vrsqrt.pop %v271
    %v273 = vmul.f32 %v271, %v272
    %vm274 = vcmp.eq.f32.partialorder %v271, inf
    %v275 = vsel %vm274, %v271, %v273
    %vm276 = vcmp.eq.f32.partialorder %v271, 0.0
    %v277 = vand.u32 %v271, 2147483648
    %v278 = vsel %vm276, %v277, %v275
    %v279 = vmul.f32 %v65, %v75
    %v280 = vmul.f32 %v278, %v279
    %v281 = vadd.f32 %v221, %v280
    %v282 = vsub.f32 %v31, %v33
    %v283 = vsub.f32 %v43, %v45
    %v284 = vmul.f32 %v282, %v282
    %v285 = vmul.f32 %v283, %v283
    %v286 = vadd.f32 %v284, %v285
    %v287 = vrsqrt.pop %v286
    %v288 = vmul.f32 %v286, %v287
    %vm289 = vcmp.eq.f32.partialorder %v286, inf
    %v290 = vsel %vm289, %v286, %v288
    %vm291 = vcmp.eq.f32.partialorder %v286, 0.0
    %v292 = vand.u32 %v286, 2147483648
    %v293 = vsel %vm291, %v292, %v290
    %v294 = vmul.f32 %v70, %v75
    %v295 = vmul.f32 %v293, %v294
    %v296 = vadd.f32 %v236, %v295
    %v297 = vadd.f32 %v266, %v281
    %v298 = vadd.f32 %v297, %v296
    %v299 = vadd.f32 %v298, %v251
    %300 = vst [vmem:[#allocation5] sm:$0xff] %v299
    // Predicated region
    $region10: #{tpu_custom_call.1} parent=1 // pred_check
      _
    $region11: #{tpu_custom_call.1} parent=1 // pred_check_branch
      %302 = sbr.rel (0) target = $region13
    $region12: #{tpu_custom_call.1} parent=1 // pred_region
      %s304 = ssub.s32 128, 128
      %305 = vsyncadd [#allocation4], %s304
      %s307 = sshll.u32 [#allocation5], 4
      %s308 = int_to_ptr.vmem [resolvable:$true] %s307
      %310 = dma.vmem_to_hbm [thread:$0]  %s308, 128, %s1, [#allocation4]
    $region13: #{tpu_custom_call.1} parent=1 // pred_fallthru
      _
    // Predicated region
    $region14: #{tpu_custom_call.1} parent=1 // pred_check
      _
    $region15: #{tpu_custom_call.1} parent=1 // pred_check_branch
      %312 = sbr.rel (0) target = $region17
    $region16: #{tpu_custom_call.1} parent=1 // pred_region
      %313 = dma.done [#allocation4], 128
    $region17: #{tpu_custom_call.1} parent=1 // pred_fallthru
      _
    %314 = vsyncpa [#allocation3], 1
    %315 = vsyncpa [#allocation4], 1

</llo_original>
